<compile_context>
chip_gen: v7x
topology: tpu7x:2x2x1
jax: 0.10.0
libtpu: 0.0.40
codegen_flags: <defaults>
</compile_context>

<pallas_src>
import jax
import jax.numpy as jnp
from jax.experimental import pallas as pl
from jax.experimental.pallas import tpu as pltpu


def qnet_kernel(xT_ref, w1_ref, b1_ref, w2_ref, b2_ref, outT_ref):
    # All operands are in the batch-on-lanes (transposed) layout:
    #   xT: [S, TB], w1: [H, S], b1: [H, 1], w2: [A, H], b2: [A, 1], outT: [A, TB]
    # fc1 + ReLU (MXU matmul, f32 accumulation; bias/ReLU on the VPU in f32)
    hT = jnp.dot(w1_ref[...], xT_ref[...], preferred_element_type=jnp.float32)
    hT = jnp.maximum(hT + b1_ref[...], 0.0)            # [H, TB] + [H, 1] bcast
    # fc2
    oT = jnp.dot(w2_ref[...], hT, preferred_element_type=jnp.float32)
    outT_ref[...] = (oT + b2_ref[...]).astype(outT_ref.dtype)


def qnet_forward(x, w1, b1, w2, b2, *, batch_tile=256):
    """x: [B, state_dim] f32 -> [B, action_dim] f32 Q-values.

    Weights are in the PyTorch nn.Linear layout:
      w1: [hidden_dim, state_dim], b1: [hidden_dim]
      w2: [action_dim, hidden_dim], b2: [action_dim]
    """
    B, S = x.shape
    H = w1.shape[0]
    A = w2.shape[0]

    # Transposed layout so every DMA in the kernel is lane-dense.
    xT = x.T                       # [S, B]  (tiny: 4*B floats)
    b1c = b1.reshape(H, 1)
    b2c = b2.reshape(A, 1)

    cost = pl.CostEstimate(
        flops=2 * B * (S * H + H * A),
        transcendentals=0,
        bytes_accessed=4 * (B * S + S * H + H + H * A + A + B * A),
    )

    if B <= batch_tile:
        # Gridless path: everything resident in VMEM, zero per-step overhead.
        vmem = pl.BlockSpec(memory_space=pltpu.MemorySpace.VMEM)
        outT = pl.pallas_call(
            qnet_kernel,
            out_shape=jax.ShapeDtypeStruct((A, B), jnp.float32),
            in_specs=[vmem] * 5,
            out_specs=vmem,
            cost_estimate=cost,
        )(xT, w1, b1c, w2, b2c)
    else:
        tb = batch_tile
        outT = pl.pallas_call(
            qnet_kernel,
            out_shape=jax.ShapeDtypeStruct((A, B), jnp.float32),
            grid=(pl.cdiv(B, tb),),            # ragged final block handled by Pallas
            in_specs=[
                pl.BlockSpec((S, tb), lambda i: (0, i)),   # xT tiled over batch (lanes)
                pl.BlockSpec((H, S), lambda i: (0, 0)),    # weights / biases resident
                pl.BlockSpec((H, 1), lambda i: (0, 0)),
                pl.BlockSpec((A, H), lambda i: (0, 0)),
                pl.BlockSpec((A, 1), lambda i: (0, 0)),
            ],
            out_specs=pl.BlockSpec((A, tb), lambda i: (0, i)),  # lane-dense store
            compiler_params=pltpu.CompilerParams(
                dimension_semantics=("parallel",),  # independent batch tiles
            ),
            cost_estimate=cost,
        )(xT, w1, b1c, w2, b2c)

    return outT.T                  # [B, A]


def init_params(key, state_dim, hidden_dim, action_dim):
    """PyTorch-style uniform(-1/sqrt(fan_in), 1/sqrt(fan_in)) init, torch layout."""
    k1, k2, k3, k4 = jax.random.split(key, 4)
    lim1 = 1.0 / jnp.sqrt(state_dim)
    lim2 = 1.0 / jnp.sqrt(hidden_dim)
    w1 = jax.random.uniform(k1, (hidden_dim, state_dim), jnp.float32, -lim1, lim1)
    b1 = jax.random.uniform(k2, (hidden_dim,), jnp.float32, -lim1, lim1)
    w2 = jax.random.uniform(k3, (action_dim, hidden_dim), jnp.float32, -lim2, lim2)
    b2 = jax.random.uniform(k4, (action_dim,), jnp.float32, -lim2, lim2)
    return w1, b1, w2, b2


if __name__ == "__main__":
    # CartPole-v0: state_dim=4, action_dim=2; hidden_dim=128 per the module.
    state_dim, hidden_dim, action_dim = 4, 128, 2

    key = jax.random.PRNGKey(0)
    kx_small, kx_big, kx_rag, kp = jax.random.split(key, 4)
    w1, b1, w2, b2 = init_params(kp, state_dim, hidden_dim, action_dim)

    def ref_fwd(x):
        return jnp.maximum(x @ w1.T + b1, 0.0) @ w2.T + b2

    # 1) Small batch (policy-network call) -> gridless single-block path.
    x_small = jax.random.normal(kx_small, (8, state_dim), jnp.float32)
    out_small = jax.block_until_ready(qnet_forward(x_small, w1, b1, w2, b2))
    assert out_small.shape == (8, action_dim)
    assert jnp.allclose(out_small, ref_fwd(x_small), atol=1e-5, rtol=1e-5)

    # 2) Replay-buffer batch -> batch-tiled grid path (parallel batch axis).
    x_big = jax.random.normal(kx_big, (512, state_dim), jnp.float32)
    out_big = jax.block_until_ready(
        qnet_forward(x_big, w1, b1, w2, b2, batch_tile=256))
    assert out_big.shape == (512, action_dim)
    assert jnp.allclose(out_big, ref_fwd(x_big), atol=1e-4, rtol=1e-4)

    # 3) Ragged batch (not a multiple of the tile) -> pl.cdiv grid, no pad copy.
    x_rag = jax.random.normal(kx_rag, (300, state_dim), jnp.float32)
    out_rag = jax.block_until_ready(
        qnet_forward(x_rag, w1, b1, w2, b2, batch_tile=256))
    assert out_rag.shape == (300, action_dim)
    assert jnp.allclose(out_rag, ref_fwd(x_rag), atol=1e-4, rtol=1e-4)

    print("KERNEL_OK")
</pallas_src>

<mosaic_0001>
module attributes {stable_mosaic.version = 11 : i64} {
  func.func @qnet_kernel(%arg0: memref<4x8xf32, #tpu.memory_space<vmem>>, %arg1: memref<128x4xf32, #tpu.memory_space<vmem>>, %arg2: memref<128x1xf32, #tpu.memory_space<vmem>>, %arg3: memref<2x128xf32, #tpu.memory_space<vmem>>, %arg4: memref<2x1xf32, #tpu.memory_space<vmem>>, %arg5: memref<2x8xf32, #tpu.memory_space<vmem>>) attributes {dimension_semantics = [], scalar_prefetch = 0 : i64, scratch_operands = 0 : i64, tpu.core_type = #tpu.core_type<tc>} {
    %c0 = arith.constant 0 : index
    %c0_0 = arith.constant 0 : index
    %0 = vector.load %arg1[%c0, %c0_0] : memref<128x4xf32, #tpu.memory_space<vmem>>, vector<128x4xf32>
    %c0_1 = arith.constant 0 : index
    %c0_2 = arith.constant 0 : index
    %1 = vector.load %arg0[%c0_1, %c0_2] : memref<4x8xf32, #tpu.memory_space<vmem>>, vector<4x8xf32>
    %cst = arith.constant dense<0.000000e+00> : vector<128x8xf32>
    %2 = tpu.matmul %0, %1, %cst {dimension_numbers = #tpu.dot_dimension_numbers<[1], [0], [0], [1], [0, 0, 1, 1], [], []>} : vector<128x4xf32>, vector<4x8xf32>, vector<128x8xf32> -> vector<128x8xf32>
    %c0_3 = arith.constant 0 : index
    %c0_4 = arith.constant 0 : index
    %3 = vector.load %arg2[%c0_3, %c0_4] : memref<128x1xf32, #tpu.memory_space<vmem>>, vector<128x1xf32>
    %4 = vector.broadcast %3 : vector<128x1xf32> to vector<128x8xf32>
    %5 = arith.addf %2, %4 : vector<128x8xf32>
    %cst_5 = arith.constant 0.000000e+00 : f32
    %6 = vector.broadcast %cst_5 : f32 to vector<128x8xf32>
    %7 = arith.maximumf %5, %6 : vector<128x8xf32>
    %c0_6 = arith.constant 0 : index
    %c0_7 = arith.constant 0 : index
    %8 = vector.load %arg3[%c0_6, %c0_7] : memref<2x128xf32, #tpu.memory_space<vmem>>, vector<2x128xf32>
    %cst_8 = arith.constant dense<0.000000e+00> : vector<2x8xf32>
    %9 = tpu.matmul %8, %7, %cst_8 {dimension_numbers = #tpu.dot_dimension_numbers<[1], [0], [0], [1], [0, 0, 1, 1], [], []>} : vector<2x128xf32>, vector<128x8xf32>, vector<2x8xf32> -> vector<2x8xf32>
    %c0_9 = arith.constant 0 : index
    %c0_10 = arith.constant 0 : index
    %10 = vector.load %arg4[%c0_9, %c0_10] : memref<2x1xf32, #tpu.memory_space<vmem>>, vector<2x1xf32>
    %11 = vector.broadcast %10 : vector<2x1xf32> to vector<2x8xf32>
    %12 = arith.addf %9, %11 : vector<2x8xf32>
    %c0_11 = arith.constant 0 : index
    %c0_12 = arith.constant 0 : index
    %13 = vector.load %arg5[%c0_11, %c0_12] : memref<2x8xf32, #tpu.memory_space<vmem>>, vector<2x8xf32>
    tpu.vector_store %arg5[%c0_11, %c0_12], %12 {strides = array<i32>} : memref<2x8xf32, #tpu.memory_space<vmem>>, vector<2x8xf32>,
    return
  }
}

</mosaic_0001>

<llo_original>
// kernel: tpu_custom_call.1
$region0: #{tpu_custom_call.1}
  #allocation0 [shape = 'u32[]', space=smem, size = 0x4, offset = 0x4, fixed_abs, tag = 'smem constant byte address 0x4 - core index']
  #allocation1 [shape = 'u32[144,128]{1,0:T(1,128)}', space=vmem, size = 0x12000, scoped, tag = 'internal scratch']
  %s0 = inlined_call_operand.vmem [shape: f32[4,8], index: 0, kind: input, shape index: {}]
  %s1 = inlined_call_operand.vmem [shape: f32[128,4], index: 1, kind: input, shape index: {}]
  %s2 = inlined_call_operand.vmem [shape: f32[128,1], index: 2, kind: input, shape index: {}]
  %s3 = inlined_call_operand.vmem [shape: f32[2,128], index: 3, kind: input, shape index: {}]
  %s4 = inlined_call_operand.vmem [shape: f32[2,1], index: 4, kind: input, shape index: {}]
  %s5 = inlined_call_operand.hbm [shape: f32[2,8], index: 5, kind: output, shape index: {}]
  %s6 = sld [smem:[#allocation0]]
  $region30: #{tpu_custom_call.1} parent=0
    _
  %s8 = ssub.s32 1, %s6
  %s9 = scalar_select 0, %s8, %s6
  $region1: #{tpu_custom_call.1} parent=0
    #allocation2 [shape = 'u8[1024]{0}', space=vmem, size = 0x400, scoped, tag = 'output window, operand 0, single buffered']
    #allocation3 [shape = 's32[1]{0}', space=sflag, size = 0x4, scoped, tag = 'scoped memory for tpu_custom_call.1']
    %10 = vsyncpa [#allocation3], 0
    // Predicated region
    $region2: #{tpu_custom_call.1} parent=1 // pred_check
      _
    $region3: #{tpu_custom_call.1} parent=1 // pred_check_branch
      %12 = sbr.rel (0) target = $region5
    $region4: #{tpu_custom_call.1} parent=1 // pred_region
      _
    $region5: #{tpu_custom_call.1} parent=1 // pred_fallthru
      _
    // Predicated region
    $region6: #{tpu_custom_call.1} parent=1 // pred_check
      _
    $region7: #{tpu_custom_call.1} parent=1 // pred_check_branch
      %14 = sbr.rel (0) target = $region9
    $region8: #{tpu_custom_call.1} parent=1 // pred_region
      _
    $region9: #{tpu_custom_call.1} parent=1 // pred_fallthru
      _
    // Predicated region
    $region10: #{tpu_custom_call.1} parent=1 // pred_check
      _
    $region11: #{tpu_custom_call.1} parent=1 // pred_check_branch
      %16 = sbr.rel (0) target = $region13
    $region12: #{tpu_custom_call.1} parent=1 // pred_region
      _
    $region13: #{tpu_custom_call.1} parent=1 // pred_fallthru
      _
    // Predicated region
    $region14: #{tpu_custom_call.1} parent=1 // pred_check
      _
    $region15: #{tpu_custom_call.1} parent=1 // pred_check_branch
      %18 = sbr.rel (0) target = $region17
    $region16: #{tpu_custom_call.1} parent=1 // pred_region
      _
    $region17: #{tpu_custom_call.1} parent=1 // pred_fallthru
      _
    // Predicated region
    $region18: #{tpu_custom_call.1} parent=1 // pred_check
      _
    $region19: #{tpu_custom_call.1} parent=1 // pred_check_branch
      %20 = sbr.rel (0) target = $region21
    $region20: #{tpu_custom_call.1} parent=1 // pred_region
      _
    $region21: #{tpu_custom_call.1} parent=1 // pred_fallthru
      _
    %v21 = vld [vmem:[%s1] sm:$0xff]
    %v22 = vld [vmem:[%s1 + $0x8] sm:$0xff]
    %v23 = vld [vmem:[%s1 + $0x10] sm:$0xff]
    %v24 = vld [vmem:[%s1 + $0x18] sm:$0xff]
    %v25 = vld [vmem:[%s1 + $0x20] sm:$0xff]
    %v26 = vld [vmem:[%s1 + $0x28] sm:$0xff]
    %v27 = vld [vmem:[%s1 + $0x30] sm:$0xff]
    %v28 = vld [vmem:[%s1 + $0x38] sm:$0xff]
    %v29 = vld [vmem:[%s1 + $0x40] sm:$0xff]
    %v30 = vld [vmem:[%s1 + $0x48] sm:$0xff]
    %v31 = vld [vmem:[%s1 + $0x50] sm:$0xff]
    %v32 = vld [vmem:[%s1 + $0x58] sm:$0xff]
    %v33 = vld [vmem:[%s1 + $0x60] sm:$0xff]
    %v34 = vld [vmem:[%s1 + $0x68] sm:$0xff]
    %v35 = vld [vmem:[%s1 + $0x70] sm:$0xff]
    %v36 = vld [vmem:[%s1 + $0x78] sm:$0xff]
    %v37 = vld [vmem:[%s0] sm:$0xf]
    %v38 = vld [vmem:[%s2] sm:$0xff]
    %v39 = vld [vmem:[%s2 + $0x8] sm:$0xff]
    %v40 = vld [vmem:[%s2 + $0x10] sm:$0xff]
    %v41 = vld [vmem:[%s2 + $0x18] sm:$0xff]
    %v42 = vld [vmem:[%s2 + $0x20] sm:$0xff]
    %v43 = vld [vmem:[%s2 + $0x28] sm:$0xff]
    %v44 = vld [vmem:[%s2 + $0x30] sm:$0xff]
    %v45 = vld [vmem:[%s2 + $0x38] sm:$0xff]
    %v46 = vld [vmem:[%s2 + $0x40] sm:$0xff]
    %v47 = vld [vmem:[%s2 + $0x48] sm:$0xff]
    %v48 = vld [vmem:[%s2 + $0x50] sm:$0xff]
    %v49 = vld [vmem:[%s2 + $0x58] sm:$0xff]
    %v50 = vld [vmem:[%s2 + $0x60] sm:$0xff]
    %v51 = vld [vmem:[%s2 + $0x68] sm:$0xff]
    %v52 = vld [vmem:[%s2 + $0x70] sm:$0xff]
    %v53 = vld [vmem:[%s2 + $0x78] sm:$0xff]
    %55 = vset.pattern.permute.xlu0 0
    %56 = vperm.xlu0 %55, %v38
    %v57 = vpop.permute.xlu0 %56
    %60 = vset.pattern.permute.xlu0 0
    %61 = vperm.xlu0 %60, %v39
    %v62 = vpop.permute.xlu0 %61
    %65 = vset.pattern.permute.xlu0 0
    %66 = vperm.xlu0 %65, %v40
    %v67 = vpop.permute.xlu0 %66
    %70 = vset.pattern.permute.xlu0 0
    %71 = vperm.xlu0 %70, %v41
    %v72 = vpop.permute.xlu0 %71
    %75 = vset.pattern.permute.xlu0 0
    %76 = vperm.xlu0 %75, %v42
    %v77 = vpop.permute.xlu0 %76
    %80 = vset.pattern.permute.xlu0 0
    %81 = vperm.xlu0 %80, %v43
    %v82 = vpop.permute.xlu0 %81
    %85 = vset.pattern.permute.xlu0 0
    %86 = vperm.xlu0 %85, %v44
    %v87 = vpop.permute.xlu0 %86
    %90 = vset.pattern.permute.xlu0 0
    %91 = vperm.xlu0 %90, %v45
    %v92 = vpop.permute.xlu0 %91
    %95 = vset.pattern.permute.xlu0 0
    %96 = vperm.xlu0 %95, %v46
    %v97 = vpop.permute.xlu0 %96
    %100 = vset.pattern.permute.xlu0 0
    %101 = vperm.xlu0 %100, %v47
    %v102 = vpop.permute.xlu0 %101
    %105 = vset.pattern.permute.xlu0 0
    %106 = vperm.xlu0 %105, %v48
    %v107 = vpop.permute.xlu0 %106
    %110 = vset.pattern.permute.xlu0 0
    %111 = vperm.xlu0 %110, %v49
    %v112 = vpop.permute.xlu0 %111
    %115 = vset.pattern.permute.xlu0 0
    %116 = vperm.xlu0 %115, %v50
    %v117 = vpop.permute.xlu0 %116
    %120 = vset.pattern.permute.xlu0 0
    %121 = vperm.xlu0 %120, %v51
    %v122 = vpop.permute.xlu0 %121
    %125 = vset.pattern.permute.xlu0 0
    %126 = vperm.xlu0 %125, %v52
    %v127 = vpop.permute.xlu0 %126
    %130 = vset.pattern.permute.xlu0 0
    %131 = vperm.xlu0 %130, %v53
    %v132 = vpop.permute.xlu0 %131
    %vm134 = vcmask 31744
    %v136 = vsel %vm134, %v21, 0
    %v139 = vsel %vm134, %v22, 0
    %v142 = vsel %vm134, %v23, 0
    %v145 = vsel %vm134, %v24, 0
    %v148 = vsel %vm134, %v25, 0
    %v151 = vsel %vm134, %v26, 0
    %v154 = vsel %vm134, %v27, 0
    %v157 = vsel %vm134, %v28, 0
    %v160 = vsel %vm134, %v29, 0
    %v163 = vsel %vm134, %v30, 0
    %v166 = vsel %vm134, %v31, 0
    %v169 = vsel %vm134, %v32, 0
    %v172 = vsel %vm134, %v33, 0
    %v175 = vsel %vm134, %v34, 0
    %v178 = vsel %vm134, %v35, 0
    %v181 = vsel %vm134, %v36, 0
    %vm183 = vcmask 1043456
    %v185 = vsel %vm183, %v37, 0
    %187 = vmatprep.subr.mxu0 0.0
    %188 = vmatpush1.msra.mxu0 %v185
    %189 = vmatprep.subr.mxu0 0.0
    %190 = vmatpush1.msra.mxu0 0.0
    %191 = vmatprep.subr.mxu0 0.0
    %192 = vmatpush1.msra.mxu0 0.0
    %193 = vmatprep.subr.mxu0 0.0
    %194 = vmatpush1.msra.mxu0 0.0
    %195 = vmatprep.subr.mxu0 0.0
    %196 = vmatpush1.msra.mxu0 0.0
    %197 = vmatprep.subr.mxu0 0.0
    %198 = vmatpush1.msra.mxu0 0.0
    %199 = vmatprep.subr.mxu0 0.0
    %200 = vmatpush1.msra.mxu0 0.0
    %201 = vmatprep.subr.mxu0 0.0
    %202 = vmatpush1.msra.mxu0 0.0
    %203 = vmatprep.subr.mxu0 0.0
    %204 = vmatpush1.msra.mxu0 0.0
    %205 = vmatprep.subr.mxu0 0.0
    %206 = vmatpush1.msra.mxu0 0.0
    %207 = vmatprep.subr.mxu0 0.0
    %208 = vmatpush1.msra.mxu0 0.0
    %209 = vmatprep.subr.mxu0 0.0
    %210 = vmatpush1.msra.mxu0 0.0
    %211 = vmatprep.subr.mxu0 0.0
    %212 = vmatpush1.msra.mxu0 0.0
    %213 = vmatprep.subr.mxu0 0.0
    %214 = vmatpush1.msra.mxu0 0.0
    %215 = vmatprep.subr.mxu0 0.0
    %216 = vmatpush1.msra.mxu0 0.0
    %217 = vmatprep.subr.mxu0 0.0
    %218 = vmatpush1.msra.mxu0 0.0
    %219 = vmatprep.subr.mxu0 0.0
    %220 = vmatpush1.msra.mxu0 0.0
    %221 = vmatprep.subr.mxu0 0.0
    %222 = vmatpush1.msra.mxu0 0.0
    %223 = vmatprep.subr.mxu0 0.0
    %224 = vmatpush1.msra.mxu0 0.0
    %225 = vmatprep.subr.mxu0 0.0
    %226 = vmatpush1.msra.mxu0 0.0
    %227 = vmatprep.subr.mxu0 0.0
    %228 = vmatpush1.msra.mxu0 0.0
    %229 = vmatprep.subr.mxu0 0.0
    %230 = vmatpush1.msra.mxu0 0.0
    %231 = vmatprep.subr.mxu0 0.0
    %232 = vmatpush1.msra.mxu0 0.0
    %233 = vmatprep.subr.mxu0 0.0
    %234 = vmatpush1.msra.mxu0 0.0
    %235 = vmatprep.subr.mxu0 0.0
    %236 = vmatpush1.msra.mxu0 0.0
    %237 = vmatprep.subr.mxu0 0.0
    %238 = vmatpush1.msra.mxu0 0.0
    %239 = vmatprep.subr.mxu0 0.0
    %240 = vmatpush1.msra.mxu0 0.0
    %241 = vmatprep.subr.mxu0 0.0
    %242 = vmatpush1.msra.mxu0 0.0
    %243 = vmatprep.subr.mxu0 0.0
    %244 = vmatpush1.msra.mxu0 0.0
    %245 = vmatprep.subr.mxu0 0.0
    %246 = vmatpush1.msra.mxu0 0.0
    %247 = vmatprep.subr.mxu0 0.0
    %248 = vmatpush1.msra.mxu0 0.0
    %249 = vmatprep.subr.mxu0 0.0
    %250 = vmatpush1.msra.mxu0 0.0
    %251 = vmatprep.mubr.f32.mxu0 0.0
    %252 = vmatmul.mubr.f32.gmra.mrb[0].mxu0 %v136
    %v253 = vpop.f32.mrb[0].mxu0
    %v254 = vadd.f32 %v57, %v253
    %v255 = vpop.f32.mrb[0].mxu0
    %256 = vmatprep.mubr.f32.mxu0 0.0
    %257 = vmatmul.mubr.f32.gmra.mrb[0].mxu0 %v139
    %v258 = vpop.f32.mrb[0].mxu0
    %v259 = vadd.f32 %v62, %v258
    %v260 = vpop.f32.mrb[0].mxu0
    %261 = vmatprep.mubr.f32.mxu0 0.0
    %262 = vmatmul.mubr.f32.gmra.mrb[0].mxu0 %v142
    %v263 = vpop.f32.mrb[0].mxu0
    %v264 = vadd.f32 %v67, %v263
    %v265 = vpop.f32.mrb[0].mxu0
    %266 = vmatprep.mubr.f32.mxu0 0.0
    %267 = vmatmul.mubr.f32.gmra.mrb[0].mxu0 %v145
    %v268 = vpop.f32.mrb[0].mxu0
    %v269 = vadd.f32 %v72, %v268
    %v270 = vpop.f32.mrb[0].mxu0
    %271 = vmatprep.mubr.f32.mxu0 0.0
    %272 = vmatmul.mubr.f32.gmra.mrb[0].mxu0 %v148
    %v273 = vpop.f32.mrb[0].mxu0
    %v274 = vadd.f32 %v77, %v273
    %v275 = vpop.f32.mrb[0].mxu0
    %276 = vmatprep.mubr.f32.mxu0 0.0
    %277 = vmatmul.mubr.f32.gmra.mrb[0].mxu0 %v151
    %v278 = vpop.f32.mrb[0].mxu0
    %v279 = vadd.f32 %v82, %v278
    %v280 = vpop.f32.mrb[0].mxu0
    %281 = vmatprep.mubr.f32.mxu0 0.0
    %282 = vmatmul.mubr.f32.gmra.mrb[0].mxu0 %v154
    %v283 = vpop.f32.mrb[0].mxu0
    %v284 = vadd.f32 %v87, %v283
    %v285 = vpop.f32.mrb[0].mxu0
    %286 = vmatprep.mubr.f32.mxu0 0.0
    %287 = vmatmul.mubr.f32.gmra.mrb[0].mxu0 %v157
    %v288 = vpop.f32.mrb[0].mxu0
    %v289 = vadd.f32 %v92, %v288
    %v290 = vpop.f32.mrb[0].mxu0
    %291 = vmatprep.mubr.f32.mxu0 0.0
    %292 = vmatmul.mubr.f32.gmra.mrb[0].mxu0 %v160
    %v293 = vpop.f32.mrb[0].mxu0
    %v294 = vadd.f32 %v97, %v293
    %v295 = vpop.f32.mrb[0].mxu0
    %296 = vmatprep.mubr.f32.mxu0 0.0
    %297 = vmatmul.mubr.f32.gmra.mrb[0].mxu0 %v163
    %v298 = vpop.f32.mrb[0].mxu0
    %v299 = vadd.f32 %v102, %v298
    %v300 = vpop.f32.mrb[0].mxu0
    %301 = vmatprep.mubr.f32.mxu0 0.0
    %302 = vmatmul.mubr.f32.gmra.mrb[0].mxu0 %v166
    %v303 = vpop.f32.mrb[0].mxu0
    %v304 = vadd.f32 %v107, %v303
    %v305 = vpop.f32.mrb[0].mxu0
    %306 = vmatprep.mubr.f32.mxu0 0.0
    %307 = vmatmul.mubr.f32.gmra.mrb[0].mxu0 %v169
    %v308 = vpop.f32.mrb[0].mxu0
    %v309 = vadd.f32 %v112, %v308
    %v310 = vpop.f32.mrb[0].mxu0
    %311 = vmatprep.mubr.f32.mxu0 0.0
    %312 = vmatmul.mubr.f32.gmra.mrb[0].mxu0 %v172
    %v313 = vpop.f32.mrb[0].mxu0
    %v314 = vadd.f32 %v117, %v313
    %v315 = vpop.f32.mrb[0].mxu0
    %316 = vmatprep.mubr.f32.mxu0 0.0
    %317 = vmatmul.mubr.f32.gmra.mrb[0].mxu0 %v175
    %v318 = vpop.f32.mrb[0].mxu0
    %v319 = vadd.f32 %v122, %v318
    %v320 = vpop.f32.mrb[0].mxu0
    %321 = vmatprep.mubr.f32.mxu0 0.0
    %322 = vmatmul.mubr.f32.gmra.mrb[0].mxu0 %v178
    %v323 = vpop.f32.mrb[0].mxu0
    %v324 = vadd.f32 %v127, %v323
    %v325 = vpop.f32.mrb[0].mxu0
    %326 = vmatprep.mubr.f32.mxu0 0.0
    %327 = vmatmul.mubr.f32.gmra.mrb[0].mxu0 %v181
    %v328 = vpop.f32.mrb[0].mxu0
    %v329 = vadd.f32 %v132, %v328
    %v330 = vpop.f32.mrb[0].mxu0
    %331 = vdwg.mxu0
    %v332 = vmax.f32 %v254, 0.0
    %v333 = vmax.f32 %v259, 0.0
    %v334 = vmax.f32 %v264, 0.0
    %v335 = vmax.f32 %v269, 0.0
    %v336 = vmax.f32 %v274, 0.0
    %v337 = vmax.f32 %v279, 0.0
    %v338 = vmax.f32 %v284, 0.0
    %v339 = vmax.f32 %v289, 0.0
    %v340 = vmax.f32 %v294, 0.0
    %v341 = vmax.f32 %v299, 0.0
    %v342 = vmax.f32 %v304, 0.0
    %v343 = vmax.f32 %v309, 0.0
    %v344 = vmax.f32 %v314, 0.0
    %v345 = vmax.f32 %v319, 0.0
    %v346 = vmax.f32 %v324, 0.0
    %v347 = vmax.f32 %v329, 0.0
    %v348 = vld [vmem:[%s3] sm:$0x3]
    %v349 = vld [vmem:[%s4] sm:$0x3]
    %351 = vset.pattern.permute.xlu0 0
    %352 = vperm.xlu0 %351, %v349
    %v353 = vpop.permute.xlu0 %352
    %355 = vmatprep.subr.mxu0 0.0
    %356 = vmatpush1.msra.mxu0 %v332
    %357 = vmatprep.subr.mxu0 0.0
    %358 = vmatpush1.msra.mxu0 %v333
    %359 = vmatprep.subr.mxu0 0.0
    %360 = vmatpush1.msra.mxu0 %v334
    %361 = vmatprep.subr.mxu0 0.0
    %362 = vmatpush1.msra.mxu0 %v335
    %363 = vmatprep.subr.mxu0 0.0
    %364 = vmatpush1.msra.mxu0 %v336
    %365 = vmatprep.subr.mxu0 0.0
    %366 = vmatpush1.msra.mxu0 %v337
    %367 = vmatprep.subr.mxu0 0.0
    %368 = vmatpush1.msra.mxu0 %v338
    %369 = vmatprep.subr.mxu0 0.0
    %370 = vmatpush1.msra.mxu0 %v339
    %371 = vmatprep.subr.mxu0 0.0
    %372 = vmatpush1.msra.mxu0 %v340
    %373 = vmatprep.subr.mxu0 0.0
    %374 = vmatpush1.msra.mxu0 %v341
    %375 = vmatprep.subr.mxu0 0.0
    %376 = vmatpush1.msra.mxu0 %v342
    %377 = vmatprep.subr.mxu0 0.0
    %378 = vmatpush1.msra.mxu0 %v343
    %379 = vmatprep.subr.mxu0 0.0
    %380 = vmatpush1.msra.mxu0 %v344
    %381 = vmatprep.subr.mxu0 0.0
    %382 = vmatpush1.msra.mxu0 %v345
    %383 = vmatprep.subr.mxu0 0.0
    %384 = vmatpush1.msra.mxu0 %v346
    %385 = vmatprep.subr.mxu0 0.0
    %386 = vmatpush1.msra.mxu0 %v347
    %387 = vmatprep.subr.mxu0 0.0
    %388 = vmatpush1.msra.mxu0 0.0
    %389 = vmatprep.subr.mxu0 0.0
    %390 = vmatpush1.msra.mxu0 0.0
    %391 = vmatprep.subr.mxu0 0.0
    %392 = vmatpush1.msra.mxu0 0.0
    %393 = vmatprep.subr.mxu0 0.0
    %394 = vmatpush1.msra.mxu0 0.0
    %395 = vmatprep.subr.mxu0 0.0
    %396 = vmatpush1.msra.mxu0 0.0
    %397 = vmatprep.subr.mxu0 0.0
    %398 = vmatpush1.msra.mxu0 0.0
    %399 = vmatprep.subr.mxu0 0.0
    %400 = vmatpush1.msra.mxu0 0.0
    %401 = vmatprep.subr.mxu0 0.0
    %402 = vmatpush1.msra.mxu0 0.0
    %403 = vmatprep.subr.mxu0 0.0
    %404 = vmatpush1.msra.mxu0 0.0
    %405 = vmatprep.subr.mxu0 0.0
    %406 = vmatpush1.msra.mxu0 0.0
    %407 = vmatprep.subr.mxu0 0.0
    %408 = vmatpush1.msra.mxu0 0.0
    %409 = vmatprep.subr.mxu0 0.0
    %410 = vmatpush1.msra.mxu0 0.0
    %411 = vmatprep.subr.mxu0 0.0
    %412 = vmatpush1.msra.mxu0 0.0
    %413 = vmatprep.subr.mxu0 0.0
    %414 = vmatpush1.msra.mxu0 0.0
    %415 = vmatprep.subr.mxu0 0.0
    %416 = vmatpush1.msra.mxu0 0.0
    %417 = vmatprep.subr.mxu0 0.0
    %418 = vmatpush1.msra.mxu0 0.0
    %419 = vmatprep.mubr.f32.mxu0 0.0
    %420 = vmatmul.mubr.f32.gmra.mrb[0].mxu0 %v348
    %v421 = vpop.f32.mrb[0].mxu0
    %v422 = vadd.f32 %v353, %v421
    %v423 = vpop.f32.mrb[0].mxu0
    %424 = vdwg.mxu0
    %vm425 = vcmask 58368
    %426 = vst.msk [vmem:[#allocation2] sm:$0x3] %vm425, %v422
    // Predicated region
    $region22: #{tpu_custom_call.1} parent=1 // pred_check
      _
    $region23: #{tpu_custom_call.1} parent=1 // pred_check_branch
      %428 = sbr.rel (0) target = $region25
    $region24: #{tpu_custom_call.1} parent=1 // pred_region
      %s430 = ssub.s32 32, 32
      %431 = vsyncadd [#allocation3], %s430
      %s433 = sshll.u32 [#allocation2], 4
      %s434 = int_to_ptr.vmem [resolvable:$true] %s433
      %436 = dma.vmem_to_hbm [thread:$0]  %s434, 32, %s5, [#allocation3]
    $region25: #{tpu_custom_call.1} parent=1 // pred_fallthru
      _
    // Predicated region
    $region26: #{tpu_custom_call.1} parent=1 // pred_check
      _
    $region27: #{tpu_custom_call.1} parent=1 // pred_check_branch
      %438 = sbr.rel (0) target = $region29
    $region28: #{tpu_custom_call.1} parent=1 // pred_region
      %439 = dma.done [#allocation3], 32
    $region29: #{tpu_custom_call.1} parent=1 // pred_fallthru
      _
    %440 = vsyncpa [#allocation3], 1

</llo_original>
